<compile_context>
chip_gen: v7x
topology: tpu7x:2x2x1
jax: 0.10.0
libtpu: 0.0.40
codegen_flags: <defaults>
</compile_context>

<pallas_src>
import functools

import jax
import jax.numpy as jnp
from jax.experimental import pallas as pl
from jax.experimental.pallas import tpu as pltpu

_H1, _H2 = 512, 256
_W3_ROWS = 8        # final-layer weight row padded to a full sublane group
_SUB = 16           # bf16 sublane packing granularity (batch-tile granule)
_LANE = 128


def _round_up(n, m):
    return ((n + m - 1) // m) * m


# ---------------------------------------------------------------------------
# Kernel
# ---------------------------------------------------------------------------
def _disc_kernel(x_ref, w1_ref, b1_ref, w2_ref, b2_ref, w3t_ref, b3_ref, o_ref):
    """Fused MLP forward for one batch tile.

    x_ref  : (tm, D)    f32  (cast to bf16 in-kernel)
    w1_ref : (D, 512)   bf16
    b1_ref : (1, 512)   f32
    w2_ref : (512, 256) bf16
    b2_ref : (1, 256)   f32
    w3t_ref: (8, 256)   bf16 (row 0 = w3^T, rows 1..7 zero)
    b3_ref : (1, 1)     f32
    o_ref  : (1, tm)    f32  -- compact lane-dense output row for this tile
    """
    x = x_ref[...].astype(jnp.bfloat16)                                    # (tm, D)

    h1 = jnp.dot(x, w1_ref[...], preferred_element_type=jnp.float32) + b1_ref[...]
    h1 = jnp.maximum(h1, 0.0).astype(jnp.bfloat16)                         # (tm, 512)

    h2 = jnp.dot(h1, w2_ref[...], preferred_element_type=jnp.float32) + b2_ref[...]
    h2 = jnp.maximum(h2, 0.0)                                              # (tm, 256) f32

    # Final layer computed transposed so the tile's logits land on the lane axis:
    # one (1, tm) output row per grid step instead of a padded (tm, 128) slab.
    h2t = jnp.transpose(h2).astype(jnp.bfloat16)                           # (256, tm)
    z = jnp.dot(w3t_ref[...], h2t, preferred_element_type=jnp.float32)     # (8, tm)
    z0 = z[0:1, :] + b3_ref[...]                                           # (1, tm)

    # sigmoid: approx reciprocal runs on the EUP slot (free relative to a VPU divide)
    o_ref[...] = pl.reciprocal(1.0 + jnp.exp(-z0), approx=True)


# ---------------------------------------------------------------------------
# Tiling / spec helpers
# ---------------------------------------------------------------------------
def _tpu_vmem_capacity():
    try:
        return int(pltpu.get_tpu_info().vmem_capacity_bytes)
    except Exception:
        return 64 * 1024 * 1024          # conservative default (v7x per-TC VMEM)


def _choose_tile(B, D, vmem_cap):
    """Pick the batch tile: VMEM- and generation-aware, as fat as possible."""
    big_vmem = vmem_cap >= 100 * 1024 * 1024     # v5e/v6e: 128 MiB; v7x: 64 MiB/TC
    target = 1024 if big_vmem else 512           # fatter tiles amortize ~0.35us/step
    budget = int(vmem_cap * 0.55)                # leave headroom for compiler scratch

    # single-buffered bf16 weights resident in VMEM
    w_bytes = 2 * (D * _H1 + _H1 * _H2 + _W3_ROWS * _H2)
    # per batch-row: double-buffered f32 x tile + f32/bf16 h1, h2 (+ transposed copy) + out
    per_row = 2 * D * 4 + _H1 * 6 + _H2 * 8 + 64
    cap_rows = max((budget - w_bytes) // per_row, _SUB)
    # TODO(synk): for very large D the resident w1 exceeds the VMEM budget; the right fix
    # is a K grid axis over D with an f32 accumulator scratch, not shrinking the batch tile.

    b16 = _round_up(B, _SUB)
    if b16 <= min(target, cap_rows):
        # Whole (padded) batch fits one tile.  Only split into two 128-aligned tiles on
        # 2-TensorCore (small-VMEM, v7x-like) parts; on single-TC chips the grid is a
        # serial loop and a second step is pure overhead.
        multi_tc = not big_vmem
        if multi_tc and B > 2 * _LANE:
            tm = _round_up(pl.cdiv(B, 2), _LANE)
        else:
            tm = b16
    else:
        tm = min(target, cap_rows)
        align = 256 if tm >= 256 else _LANE      # 256-wide bf16 MXU edge on v6e/v7x
        tm = max((tm // align) * align, _LANE)
    b_pad = _round_up(B, tm)
    return tm, b_pad


try:
    _SINGLE_BUFFER = pl.Buffered(1)   # grid-invariant operands don't need double buffering
except Exception:                     # pragma: no cover - older/newer API fallback
    _SINGLE_BUFFER = None


def _resident_spec(shape):
    """BlockSpec for a grid-invariant (constant index map) operand."""
    idx = lambda i: (0,) * len(shape)
    if _SINGLE_BUFFER is not None:
        try:
            return pl.BlockSpec(shape, idx, pipeline_mode=_SINGLE_BUFFER)
        except TypeError:
            pass
    return pl.BlockSpec(shape, idx)


# ---------------------------------------------------------------------------
# Wrapper
# ---------------------------------------------------------------------------
def prepare_params(params):
    """One-time operand prep (cast / pad / transpose) -- call once, outside the hot loop."""
    w3t = jnp.pad(params["w3"].astype(jnp.float32).T, ((0, _W3_ROWS - 1), (0, 0)))
    return {
        "w1": params["w1"].astype(jnp.bfloat16),                   # (D, 512)
        "b1": params["b1"].reshape(1, _H1).astype(jnp.float32),
        "w2": params["w2"].astype(jnp.bfloat16),                   # (512, 256)
        "b2": params["b2"].reshape(1, _H2).astype(jnp.float32),
        "w3t": w3t.astype(jnp.bfloat16),                           # (8, 256), row 0 = w3^T
        "b3": params["b3"].reshape(1, 1).astype(jnp.float32),
    }


@functools.partial(jax.jit, static_argnames=("tm", "b_pad", "vmem_limit"))
def _forward(x, prepped, *, tm, b_pad, vmem_limit):
    B, D = x.shape
    # TODO(synk): a masked last tile would avoid this pad copy of x for ragged batches.
    x_p = x if b_pad == B else jnp.pad(x, ((0, b_pad - B), (0, 0)))

    out = pl.pallas_call(
        _disc_kernel,
        out_shape=jax.ShapeDtypeStruct((1, b_pad), jnp.float32),
        grid_spec=pltpu.PrefetchScalarGridSpec(
            num_scalar_prefetch=0,
            grid=(b_pad // tm,),
            in_specs=[
                pl.BlockSpec((tm, D), lambda i: (i, 0)),      # x tile over batch (f32)
                _resident_spec((D, _H1)),                     # w1
                _resident_spec((1, _H1)),                     # b1
                _resident_spec((_H1, _H2)),                   # w2
                _resident_spec((1, _H2)),                     # b2
                _resident_spec((_W3_ROWS, _H2)),              # w3^T (8 rows, row 0 real)
                _resident_spec((1, 1)),                       # b3
            ],
            out_specs=pl.BlockSpec((1, tm), lambda i: (0, i)),  # compact lane-dense output
        ),
        compiler_params=pltpu.CompilerParams(
            dimension_semantics=("parallel",),
            vmem_limit_bytes=vmem_limit,
        ),
    )(x_p, prepped["w1"], prepped["b1"], prepped["w2"], prepped["b2"],
      prepped["w3t"], prepped["b3"])
    # drop batch padding; restore the (B, 1) module output shape
    return out[0, :B].reshape(B, 1)


def discriminator_forward(x, prepped):
    """x: [B, D] float32.  prepped: output of prepare_params()."""
    B, D = x.shape
    vmem_cap = _tpu_vmem_capacity()
    tm, b_pad = _choose_tile(B, D, vmem_cap)
    vmem_limit = min(96 * 1024 * 1024, (vmem_cap * 3) // 4)   # ~48 MiB on v7x, 96 MiB on v5e/v6e
    return _forward(x, prepped, tm=tm, b_pad=b_pad, vmem_limit=vmem_limit)


# ---------------------------------------------------------------------------
# Init + references + self-test
# ---------------------------------------------------------------------------
def init_discriminator_params(key, input_dim):
    """Deterministic init matching PyTorch nn.Linear shapes (weights stored as (in, out))."""
    dims = [(input_dim, _H1), (_H1, _H2), (_H2, 1)]
    params = {}
    for idx, (fan_in, fan_out) in enumerate(dims, start=1):
        key, kw, kb = jax.random.split(key, 3)
        bound = 1.0 / jnp.sqrt(jnp.float32(fan_in))
        params[f"w{idx}"] = jax.random.uniform(
            kw, (fan_in, fan_out), jnp.float32, minval=-bound, maxval=bound)
        params[f"b{idx}"] = jax.random.uniform(
            kb, (fan_out,), jnp.float32, minval=-bound, maxval=bound)
    return params


def _reference_forward(x, params):
    # exact f32 reference == PyTorch module semantics
    h1 = jnp.maximum(x @ params["w1"] + params["b1"], 0.0)
    h2 = jnp.maximum(h1 @ params["w2"] + params["b2"], 0.0)
    return jax.nn.sigmoid(h2 @ params["w3"] + params["b3"])


def _reference_forward_bf16(x, params):
    # emulates the kernel's arithmetic: bf16 matmul operands, f32 accumulation / epilogue
    bf = lambda a: a.astype(jnp.bfloat16)
    h1 = jnp.dot(bf(x), bf(params["w1"]), preferred_element_type=jnp.float32) + params["b1"]
    h1 = bf(jnp.maximum(h1, 0.0))
    h2 = jnp.dot(h1, bf(params["w2"]), preferred_element_type=jnp.float32) + params["b2"]
    h2 = bf(jnp.maximum(h2, 0.0))
    logits = jnp.dot(h2, bf(params["w3"]), preferred_element_type=jnp.float32) + params["b3"]
    return jax.nn.sigmoid(logits)


if __name__ == "__main__":
    key = jax.random.PRNGKey(0)
    k_params, k_x = jax.random.split(key)

    batch = 8
    input_dim = 32

    params = init_discriminator_params(k_params, input_dim)
    prepped = prepare_params(params)
    x = jax.random.normal(k_x, (batch, input_dim), dtype=jnp.float32)

    out = jax.block_until_ready(discriminator_forward(x, prepped))
    assert out.shape == (batch, 1), out.shape

    # loose check vs. exact-f32 (PyTorch-equivalent) reference — slack covers bf16 operands
    ref_f32 = _reference_forward(x, params)
    assert jnp.allclose(out, ref_f32, atol=5e-2, rtol=5e-2), "mismatch vs f32 reference"

    # tight check vs. a reference using the same bf16-operand / f32-accumulate arithmetic
    ref_bf16 = _reference_forward_bf16(x, params)
    assert jnp.allclose(out, ref_bf16, atol=5e-3, rtol=5e-3), "mismatch vs bf16 reference"

    print("KERNEL_OK")
</pallas_src>

<mosaic_0001>
module attributes {stable_mosaic.version = 11 : i64} {
  func.func @_disc_kernel(%arg0: i32, %arg1: memref<16x32xf32, #tpu.memory_space<vmem>>, %arg2: memref<32x512xbf16, #tpu.memory_space<vmem>>, %arg3: memref<1x512xf32, #tpu.memory_space<vmem>>, %arg4: memref<512x256xbf16, #tpu.memory_space<vmem>>, %arg5: memref<1x256xf32, #tpu.memory_space<vmem>>, %arg6: memref<8x256xbf16, #tpu.memory_space<vmem>>, %arg7: memref<1x1xf32, #tpu.memory_space<vmem>>, %arg8: memref<1x16xf32, #tpu.memory_space<vmem>>) attributes {dimension_semantics = [#tpu.dimension_semantics<parallel>], iteration_bounds = array<i64: 1>, scalar_prefetch = 0 : i64, scratch_operands = 0 : i64, tpu.core_type = #tpu.core_type<tc>, window_params = [{transform_indices = @transform_0, window_bounds = array<i64: 16, 32>}, {pipeline_mode = #tpu.pipeline_mode<synchronous>, transform_indices = @transform_1, window_bounds = array<i64: 32, 512>}, {pipeline_mode = #tpu.pipeline_mode<synchronous>, transform_indices = @transform_2, window_bounds = array<i64: 1, 512>}, {pipeline_mode = #tpu.pipeline_mode<synchronous>, transform_indices = @transform_3, window_bounds = array<i64: 512, 256>}, {pipeline_mode = #tpu.pipeline_mode<synchronous>, transform_indices = @transform_4, window_bounds = array<i64: 1, 256>}, {pipeline_mode = #tpu.pipeline_mode<synchronous>, transform_indices = @transform_5, window_bounds = array<i64: 8, 256>}, {pipeline_mode = #tpu.pipeline_mode<synchronous>, transform_indices = @transform_6, window_bounds = array<i64: 1, 1>}, {transform_indices = @transform_7, window_bounds = array<i64: 1, 16>}]} {
    %c0 = arith.constant 0 : index
    %c0_0 = arith.constant 0 : index
    %0 = vector.load %arg1[%c0, %c0_0] : memref<16x32xf32, #tpu.memory_space<vmem>>, vector<16x32xf32>
    %1 = arith.truncf %0 : vector<16x32xf32> to vector<16x32xbf16>
    %c0_1 = arith.constant 0 : index
    %c0_2 = arith.constant 0 : index
    %2 = vector.load %arg2[%c0_1, %c0_2] : memref<32x512xbf16, #tpu.memory_space<vmem>>, vector<32x512xbf16>
    %cst = arith.constant dense<0.000000e+00> : vector<16x512xf32>
    %3 = tpu.matmul %1, %2, %cst {dimension_numbers = #tpu.dot_dimension_numbers<[1], [0], [0], [1], [0, 0, 1, 1], [], []>} : vector<16x32xbf16>, vector<32x512xbf16>, vector<16x512xf32> -> vector<16x512xf32>
    %c0_3 = arith.constant 0 : index
    %c0_4 = arith.constant 0 : index
    %4 = vector.load %arg3[%c0_3, %c0_4] : memref<1x512xf32, #tpu.memory_space<vmem>>, vector<1x512xf32>
    %5 = vector.broadcast %4 : vector<1x512xf32> to vector<16x512xf32>
    %6 = arith.addf %3, %5 : vector<16x512xf32>
    %cst_5 = arith.constant 0.000000e+00 : f32
    %7 = vector.broadcast %cst_5 : f32 to vector<16x512xf32>
    %8 = arith.maximumf %6, %7 : vector<16x512xf32>
    %9 = arith.truncf %8 : vector<16x512xf32> to vector<16x512xbf16>
    %c0_6 = arith.constant 0 : index
    %c0_7 = arith.constant 0 : index
    %10 = vector.load %arg4[%c0_6, %c0_7] : memref<512x256xbf16, #tpu.memory_space<vmem>>, vector<512x256xbf16>
    %cst_8 = arith.constant dense<0.000000e+00> : vector<16x256xf32>
    %11 = tpu.matmul %9, %10, %cst_8 {dimension_numbers = #tpu.dot_dimension_numbers<[1], [0], [0], [1], [0, 0, 1, 1], [], []>} : vector<16x512xbf16>, vector<512x256xbf16>, vector<16x256xf32> -> vector<16x256xf32>
    %c0_9 = arith.constant 0 : index
    %c0_10 = arith.constant 0 : index
    %12 = vector.load %arg5[%c0_9, %c0_10] : memref<1x256xf32, #tpu.memory_space<vmem>>, vector<1x256xf32>
    %13 = vector.broadcast %12 : vector<1x256xf32> to vector<16x256xf32>
    %14 = arith.addf %11, %13 : vector<16x256xf32>
    %cst_11 = arith.constant 0.000000e+00 : f32
    %15 = vector.broadcast %cst_11 : f32 to vector<16x256xf32>
    %16 = arith.maximumf %14, %15 : vector<16x256xf32>
    %17 = tpu.transpose %16, [1, 0] : vector<16x256xf32> -> vector<256x16xf32>
    %18 = arith.truncf %17 : vector<256x16xf32> to vector<256x16xbf16>
    %c0_12 = arith.constant 0 : index
    %c0_13 = arith.constant 0 : index
    %19 = vector.load %arg6[%c0_12, %c0_13] : memref<8x256xbf16, #tpu.memory_space<vmem>>, vector<8x256xbf16>
    %cst_14 = arith.constant dense<0.000000e+00> : vector<8x16xf32>
    %20 = tpu.matmul %19, %18, %cst_14 {dimension_numbers = #tpu.dot_dimension_numbers<[1], [0], [0], [1], [0, 0, 1, 1], [], []>} : vector<8x256xbf16>, vector<256x16xbf16>, vector<8x16xf32> -> vector<8x16xf32>
    %21 = vector.extract_strided_slice %20 {offsets = [0, 0], sizes = [1, 16], strides = [1, 1]} : vector<8x16xf32> to vector<1x16xf32>
    %c0_15 = arith.constant 0 : index
    %c0_16 = arith.constant 0 : index
    %22 = vector.load %arg7[%c0_15, %c0_16] : memref<1x1xf32, #tpu.memory_space<vmem>>, vector<1x1xf32>
    %23 = vector.broadcast %22 : vector<1x1xf32> to vector<1x16xf32>
    %24 = arith.addf %21, %23 : vector<1x16xf32>
    %cst_17 = arith.constant 0.000000e+00 : f32
    %25 = vector.broadcast %cst_17 : f32 to vector<1x16xf32>
    %26 = arith.subf %25, %24 : vector<1x16xf32>
    %27 = math.exp %26 : vector<1x16xf32>
    %cst_18 = arith.constant 1.000000e+00 : f32
    %28 = vector.broadcast %cst_18 : f32 to vector<1x16xf32>
    %29 = arith.addf %28, %27 : vector<1x16xf32>
    %30 = tpu.reciprocal %29 {approx = true} : vector<1x16xf32> -> vector<1x16xf32>
    %c0_19 = arith.constant 0 : index
    %c0_20 = arith.constant 0 : index
    %31 = vector.load %arg8[%c0_19, %c0_20] : memref<1x16xf32, #tpu.memory_space<vmem>>, vector<1x16xf32>
    tpu.vector_store %arg8[%c0_19, %c0_20], %30 {strides = array<i32>} : memref<1x16xf32, #tpu.memory_space<vmem>>, vector<1x16xf32>,
    return
  }
  func.func @transform_0(%arg0: i32) -> (i32, i32) {
    %c0_i32 = arith.constant 0 : i32
    %c0_i32_0 = arith.constant 0 : i32
    return %arg0, %c0_i32 : i32, i32
  }
  func.func @transform_1(%arg0: i32) -> (i32, i32) {
    %c0_i32 = arith.constant 0 : i32
    %c0_i32_0 = arith.constant 0 : i32
    %c0_i32_1 = arith.constant 0 : i32
    return %c0_i32, %c0_i32_0 : i32, i32
  }
  func.func @transform_2(%arg0: i32) -> (i32, i32) {
    %c0_i32 = arith.constant 0 : i32
    %c0_i32_0 = arith.constant 0 : i32
    %c0_i32_1 = arith.constant 0 : i32
    return %c0_i32, %c0_i32_0 : i32, i32
  }
  func.func @transform_3(%arg0: i32) -> (i32, i32) {
    %c0_i32 = arith.constant 0 : i32
    %c0_i32_0 = arith.constant 0 : i32
    %c0_i32_1 = arith.constant 0 : i32
    return %c0_i32, %c0_i32_0 : i32, i32
  }
  func.func @transform_4(%arg0: i32) -> (i32, i32) {
    %c0_i32 = arith.constant 0 : i32
    %c0_i32_0 = arith.constant 0 : i32
    %c0_i32_1 = arith.constant 0 : i32
    return %c0_i32, %c0_i32_0 : i32, i32
  }
  func.func @transform_5(%arg0: i32) -> (i32, i32) {
    %c0_i32 = arith.constant 0 : i32
    %c0_i32_0 = arith.constant 0 : i32
    %c0_i32_1 = arith.constant 0 : i32
    return %c0_i32, %c0_i32_0 : i32, i32
  }
  func.func @transform_6(%arg0: i32) -> (i32, i32) {
    %c0_i32 = arith.constant 0 : i32
    %c0_i32_0 = arith.constant 0 : i32
    %c0_i32_1 = arith.constant 0 : i32
    return %c0_i32, %c0_i32_0 : i32, i32
  }
  func.func @transform_7(%arg0: i32) -> (i32, i32) {
    %c0_i32 = arith.constant 0 : i32
    %c0_i32_0 = arith.constant 0 : i32
    return %c0_i32, %arg0 : i32, i32
  }
}

</mosaic_0001>

<llo_original>
// kernel: _forward.1
$region0: #{_forward.1}
  #allocation0 [shape = 'u32[]', space=smem, size = 0x4, offset = 0x4, fixed_abs, tag = 'smem constant byte address 0x4 - core index']
  #allocation1 [shape = 'u32[144,128]{1,0:T(1,128)}', space=vmem, size = 0x12000, scoped, tag = 'internal scratch']
  #allocation2 [shape = 'f32[1,1]{1,0:T(1,128)S(1)}', space=vmem, size = 0x200, scoped, tag = 'scoped memory for _forward.1']
  %s0 = inlined_call_operand.vmem [shape: f32[16,32], index: 0, kind: input, shape index: {}]
  %s1 = inlined_call_operand.hbm [shape: bf16[32,512], index: 1, kind: input, shape index: {}]
  %s2 = inlined_call_operand.vmem [shape: f32[1,512], index: 2, kind: input, shape index: {}]
  %s3 = inlined_call_operand.hbm [shape: bf16[512,256], index: 3, kind: input, shape index: {}]
  %s4 = inlined_call_operand.vmem [shape: f32[1,256], index: 4, kind: input, shape index: {}]
  %s5 = inlined_call_operand.vmem [shape: bf16[8,256], index: 5, kind: input, shape index: {}]
  %s6 = inlined_call_operand.<no memory space> [shape: f32[1,1], index: 6, kind: input, shape index: {}]
  %s7 = inlined_call_operand.vmem [shape: f32[1,16], index: 7, kind: output, shape index: {}]
  %s8 = sld [smem:[#allocation0]]
  $region46: #{_forward.1} parent=0
    _
  %s10 = ssub.s32 1, %s8
  %s11 = scalar_select 0, %s10, %s8
  %v12 = vstv %s6
  %13 = vst [vmem:[#allocation2] sm:$0x1] %v12
  $region1: #{_forward.1} parent=0
    #allocation3 [shape = 'u8[32768]{0}', space=vmem, size = 0x8000, scoped, tag = 'input window, operand 1, single buffered']
    #allocation4 [shape = 's32[1]{0}', space=sflag, size = 0x4, scoped, tag = 'scoped memory for _forward.1']
    #allocation5 [shape = 'u8[262144]{0}', space=vmem, size = 0x40000, scoped, tag = 'input window, operand 3, single buffered']
    #allocation6 [shape = 's32[1]{0}', space=sflag, size = 0x4, scoped, tag = 'scoped memory for _forward.1']
    %14 = vsyncpa [#allocation4], 0
    %15 = vsyncpa [#allocation6], 0
    // Predicated region
    $region2: #{_forward.1} parent=1 // pred_check
      _
    $region3: #{_forward.1} parent=1 // pred_check_branch
      %17 = sbr.rel (0) target = $region5
    $region4: #{_forward.1} parent=1 // pred_region
      _
    $region5: #{_forward.1} parent=1 // pred_fallthru
      _
    // Predicated region
    $region6: #{_forward.1} parent=1 // pred_check
      _
    $region7: #{_forward.1} parent=1 // pred_check_branch
      %19 = sbr.rel (0) target = $region9
    $region8: #{_forward.1} parent=1 // pred_region
      %s21 = ssub.s32 1024, 1024
      %22 = vsyncadd [#allocation4], %s21
      %s23 = sshll.u32 [#allocation3], 4
      %s24 = int_to_ptr.vmem [resolvable:$true] %s23
      %29 = dma.hbm_to_vmem [thread:$0]  %s1, 1024, %s24, [#allocation4], 256, 256, 16
    $region9: #{_forward.1} parent=1 // pred_fallthru
      _
    // Predicated region
    $region10: #{_forward.1} parent=1 // pred_check
      _
    $region11: #{_forward.1} parent=1 // pred_check_branch
      %31 = sbr.rel (0) target = $region13
    $region12: #{_forward.1} parent=1 // pred_region
      _
    $region13: #{_forward.1} parent=1 // pred_fallthru
      _
    // Predicated region
    $region14: #{_forward.1} parent=1 // pred_check
      _
    $region15: #{_forward.1} parent=1 // pred_check_branch
      %33 = sbr.rel (0) target = $region17
    $region16: #{_forward.1} parent=1 // pred_region
      %s35 = ssub.s32 8192, 8192
      %36 = vsyncadd [#allocation6], %s35
      %s37 = sshll.u32 [#allocation5], 4
      %s38 = int_to_ptr.vmem [resolvable:$true] %s37
      %43 = dma.hbm_to_vmem [thread:$0]  %s3, 8192, %s38, [#allocation6], 128, 128, 8
    $region17: #{_forward.1} parent=1 // pred_fallthru
      _
    // Predicated region
    $region18: #{_forward.1} parent=1 // pred_check
      _
    $region19: #{_forward.1} parent=1 // pred_check_branch
      %45 = sbr.rel (0) target = $region21
    $region20: #{_forward.1} parent=1 // pred_region
      _
    $region21: #{_forward.1} parent=1 // pred_fallthru
      _
    // Predicated region
    $region22: #{_forward.1} parent=1 // pred_check
      _
    $region23: #{_forward.1} parent=1 // pred_check_branch
      %47 = sbr.rel (0) target = $region25
    $region24: #{_forward.1} parent=1 // pred_region
      _
    $region25: #{_forward.1} parent=1 // pred_fallthru
      _
    // Predicated region
    $region26: #{_forward.1} parent=1 // pred_check
      _
    $region27: #{_forward.1} parent=1 // pred_check_branch
      %49 = sbr.rel (0) target = $region29
    $region28: #{_forward.1} parent=1 // pred_region
      _
    $region29: #{_forward.1} parent=1 // pred_fallthru
      _
    // Predicated region
    $region30: #{_forward.1} parent=1 // pred_check
      _
    $region31: #{_forward.1} parent=1 // pred_check_branch
      %51 = sbr.rel (0) target = $region33
    $region32: #{_forward.1} parent=1 // pred_region
      %52 = dma.done [#allocation4], 1024
    $region33: #{_forward.1} parent=1 // pred_fallthru
      _
    // Predicated region
    $region34: #{_forward.1} parent=1 // pred_check
      _
    $region35: #{_forward.1} parent=1 // pred_check_branch
      %54 = sbr.rel (0) target = $region37
    $region36: #{_forward.1} parent=1 // pred_region
      %55 = dma.done [#allocation6], 8192
    $region37: #{_forward.1} parent=1 // pred_fallthru
      _
    %v57 = vld [vmem:[%s0] sm:$0xff]
    %v58 = vld [vmem:[%s0 + $0x8] sm:$0xff]
    %v59 = vpack.c.bf16 %v58, %v57
    %v60 = vld [vmem:[#allocation3] sm:$0xff]
    %v61 = vld [vmem:[#allocation3 + $0x8] sm:$0xff]
    %v62 = vld [vmem:[#allocation3 + $0x10] sm:$0xff]
    %v63 = vld [vmem:[#allocation3 + $0x18] sm:$0xff]
    %v64 = vld [vmem:[#allocation3 + $0x20] sm:$0xff]
    %v65 = vld [vmem:[#allocation3 + $0x28] sm:$0xff]
    %v66 = vld [vmem:[#allocation3 + $0x30] sm:$0xff]
    %v67 = vld [vmem:[#allocation3 + $0x38] sm:$0xff]
    %v68 = vld [vmem:[%s2] sm:$0xf]
    %v70 = vlaneseq
    %v71 = vshrl.u32 %v70, 7
    %v72 = vsub.s32 0, %v71
    %v73 = vrot.slane %v68, %v72
    %v74 = vlaneseq
    %v75 = vshrl.u32 %v74, 7
    %v76 = vsub.s32 1, %v75
    %v77 = vrot.slane %v68, %v76
    %v78 = vlaneseq
    %v79 = vshrl.u32 %v78, 7
    %v80 = vsub.s32 2, %v79
    %v81 = vrot.slane %v68, %v80
    %v82 = vlaneseq
    %v83 = vshrl.u32 %v82, 7
    %v84 = vsub.s32 3, %v83
    %v85 = vrot.slane %v68, %v84
    %v98 = vunpack.c.l.b16 %v60
    %v99 = vunpack.c.h.b16 %v60
    %v100 = vunpack.c.l.b16 %v61
    %v101 = vunpack.c.h.b16 %v61
    %v102 = vunpack.c.l.b16 %v62
    %v103 = vunpack.c.h.b16 %v62
    %v104 = vunpack.c.l.b16 %v63
    %v105 = vunpack.c.h.b16 %v63
    %v106 = vunpack.c.l.b16 %v64
    %v107 = vunpack.c.h.b16 %v64
    %v108 = vunpack.c.l.b16 %v65
    %v109 = vunpack.c.h.b16 %v65
    %v110 = vunpack.c.l.b16 %v66
    %v111 = vunpack.c.h.b16 %v66
    %v112 = vunpack.c.l.b16 %v67
    %v113 = vunpack.c.h.b16 %v67
    %v114 = vpack.c.b16 %v102, %v98
    %v115 = vpack.c.b16 %v103, %v99
    %v116 = vpack.c.b16 %v104, %v100
    %v117 = vpack.c.b16 %v105, %v101
    %v118 = vpack.c.b16 %v110, %v106
    %v119 = vpack.c.b16 %v111, %v107
    %v120 = vpack.c.b16 %v112, %v108
    %v121 = vpack.c.b16 %v113, %v109
    %vm130 = vcmask 261120
    %v132 = vsel %vm130, %v59, 0
    %134 = vmatprep.subr.bf16.mxu0 %v115
    %135 = vmatpush1.bf16.msra.mxu0 %v114
    %136 = vmatprep.subr.bf16.mxu0 %v119
    %137 = vmatpush1.bf16.msra.mxu0 %v118
    %138 = vmatprep.subr.bf16.mxu0 0
    %139 = vmatpush1.bf16.msra.mxu0 0
    %140 = vmatprep.subr.bf16.mxu0 0
    %141 = vmatpush1.bf16.msra.mxu0 0
    %142 = vmatprep.subr.bf16.mxu0 0
    %143 = vmatpush1.bf16.msra.mxu0 0
    %144 = vmatprep.subr.bf16.mxu0 0
    %145 = vmatpush1.bf16.msra.mxu0 0
    %146 = vmatprep.subr.bf16.mxu0 0
    %147 = vmatpush1.bf16.msra.mxu0 0
    %148 = vmatprep.subr.bf16.mxu0 0
    %149 = vmatpush1.bf16.msra.mxu0 0
    %150 = vmatprep.subr.bf16.mxu0 0
    %151 = vmatpush1.bf16.msra.mxu0 0
    %152 = vmatprep.subr.bf16.mxu0 0
    %153 = vmatpush1.bf16.msra.mxu0 0
    %154 = vmatprep.subr.bf16.mxu0 0
    %155 = vmatpush1.bf16.msra.mxu0 0
    %156 = vmatprep.subr.bf16.mxu0 0
    %157 = vmatpush1.bf16.msra.mxu0 0
    %158 = vmatprep.subr.bf16.mxu0 0
    %159 = vmatpush1.bf16.msra.mxu0 0
    %160 = vmatprep.subr.bf16.mxu0 0
    %161 = vmatpush1.bf16.msra.mxu0 0
    %162 = vmatprep.subr.bf16.mxu0 0
    %163 = vmatpush1.bf16.msra.mxu0 0
    %164 = vmatprep.subr.bf16.mxu0 0
    %165 = vmatpush1.bf16.msra.mxu0 0
    %166 = vmatprep.mubr.bf16.mxu0 0
    %167 = vmatmul.mubr.bf16.gmra.mrb[0].mxu0 %v132
    %v168 = vpop.f32.mrb[0].mxu0
    %v169 = vadd.f32 %v73, %v168
    %v170 = vpop.f32.mrb[0].mxu0
    %v171 = vadd.f32 %v77, %v170
    %v172 = vpop.f32.mrb[0].mxu0
    %v173 = vadd.f32 %v73, %v172
    %v174 = vpop.f32.mrb[0].mxu0
    %v175 = vadd.f32 %v77, %v174
    %176 = vdwg.mxu0
    %177 = vmatprep.subr.bf16.mxu0 %v117
    %178 = vmatpush1.bf16.msra.mxu0 %v116
    %179 = vmatprep.subr.bf16.mxu0 %v121
    %180 = vmatpush1.bf16.msra.mxu0 %v120
    %181 = vmatprep.subr.bf16.mxu0 0
    %182 = vmatpush1.bf16.msra.mxu0 0
    %183 = vmatprep.subr.bf16.mxu0 0
    %184 = vmatpush1.bf16.msra.mxu0 0
    %185 = vmatprep.subr.bf16.mxu0 0
    %186 = vmatpush1.bf16.msra.mxu0 0
    %187 = vmatprep.subr.bf16.mxu0 0
    %188 = vmatpush1.bf16.msra.mxu0 0
    %189 = vmatprep.subr.bf16.mxu0 0
    %190 = vmatpush1.bf16.msra.mxu0 0
    %191 = vmatprep.subr.bf16.mxu0 0
    %192 = vmatpush1.bf16.msra.mxu0 0
    %193 = vmatprep.subr.bf16.mxu0 0
    %194 = vmatpush1.bf16.msra.mxu0 0
    %195 = vmatprep.subr.bf16.mxu0 0
    %196 = vmatpush1.bf16.msra.mxu0 0
    %197 = vmatprep.subr.bf16.mxu0 0
    %198 = vmatpush1.bf16.msra.mxu0 0
    %199 = vmatprep.subr.bf16.mxu0 0
    %200 = vmatpush1.bf16.msra.mxu0 0
    %201 = vmatprep.subr.bf16.mxu0 0
    %202 = vmatpush1.bf16.msra.mxu0 0
    %203 = vmatprep.subr.bf16.mxu0 0
    %204 = vmatpush1.bf16.msra.mxu0 0
    %205 = vmatprep.subr.bf16.mxu0 0
    %206 = vmatpush1.bf16.msra.mxu0 0
    %207 = vmatprep.subr.bf16.mxu0 0
    %208 = vmatpush1.bf16.msra.mxu0 0
    %209 = vmatprep.mubr.bf16.mxu0 0
    %210 = vmatmul.mubr.bf16.gmra.mrb[0].mxu0 %v132
    %v211 = vpop.f32.mrb[0].mxu0
    %v212 = vadd.f32 %v81, %v211
    %v213 = vpop.f32.mrb[0].mxu0
    %v214 = vadd.f32 %v85, %v213
    %v215 = vpop.f32.mrb[0].mxu0
    %v216 = vadd.f32 %v81, %v215
    %v217 = vpop.f32.mrb[0].mxu0
    %v218 = vadd.f32 %v85, %v217
    %219 = vdwg.mxu0
    %v220 = vmax.f32 %v169, 0.0
    %v221 = vmax.f32 %v171, 0.0
    %v222 = vmax.f32 %v212, 0.0
    %v223 = vmax.f32 %v214, 0.0
    %v224 = vmax.f32 %v173, 0.0
    %v225 = vmax.f32 %v175, 0.0
    %v226 = vmax.f32 %v216, 0.0
    %v227 = vmax.f32 %v218, 0.0
    %v228 = vpack.c.bf16 %v224, %v220
    %v229 = vpack.c.bf16 %v225, %v221
    %v230 = vpack.c.bf16 %v226, %v222
    %v231 = vpack.c.bf16 %v227, %v223
    %v232 = vld [vmem:[#allocation5] sm:$0xff]
    %v233 = vld [vmem:[#allocation5 + $0x8] sm:$0xff]
    %v234 = vld [vmem:[#allocation5 + $0x10] sm:$0xff]
    %v235 = vld [vmem:[#allocation5 + $0x18] sm:$0xff]
    %v236 = vld [vmem:[#allocation5 + $0x20] sm:$0xff]
    %v237 = vld [vmem:[#allocation5 + $0x28] sm:$0xff]
    %v238 = vld [vmem:[#allocation5 + $0x30] sm:$0xff]
    %v239 = vld [vmem:[#allocation5 + $0x38] sm:$0xff]
    %v240 = vld [vmem:[#allocation5 + $0x40] sm:$0xff]
    %v241 = vld [vmem:[#allocation5 + $0x48] sm:$0xff]
    %v242 = vld [vmem:[#allocation5 + $0x50] sm:$0xff]
    %v243 = vld [vmem:[#allocation5 + $0x58] sm:$0xff]
    %v244 = vld [vmem:[#allocation5 + $0x60] sm:$0xff]
    %v245 = vld [vmem:[#allocation5 + $0x68] sm:$0xff]
    %v246 = vld [vmem:[#allocation5 + $0x70] sm:$0xff]
    %v247 = vld [vmem:[#allocation5 + $0x78] sm:$0xff]
    %v248 = vld [vmem:[#allocation5 + $0x80] sm:$0xff]
    %v249 = vld [vmem:[#allocation5 + $0x88] sm:$0xff]
    %v250 = vld [vmem:[#allocation5 + $0x90] sm:$0xff]
    %v251 = vld [vmem:[#allocation5 + $0x98] sm:$0xff]
    %v252 = vld [vmem:[#allocation5 + $0xa0] sm:$0xff]
    %v253 = vld [vmem:[#allocation5 + $0xa8] sm:$0xff]
    %v254 = vld [vmem:[#allocation5 + $0xb0] sm:$0xff]
    %v255 = vld [vmem:[#allocation5 + $0xb8] sm:$0xff]
    %v256 = vld [vmem:[#allocation5 + $0xc0] sm:$0xff]
    %v257 = vld [vmem:[#allocation5 + $0xc8] sm:$0xff]
    %v258 = vld [vmem:[#allocation5 + $0xd0] sm:$0xff]
    %v259 = vld [vmem:[#allocation5 + $0xd8] sm:$0xff]
    %v260 = vld [vmem:[#allocation5 + $0xe0] sm:$0xff]
    %v261 = vld [vmem:[#allocation5 + $0xe8] sm:$0xff]
    %v262 = vld [vmem:[#allocation5 + $0xf0] sm:$0xff]
    %v263 = vld [vmem:[#allocation5 + $0xf8] sm:$0xff]
    %v264 = vld [vmem:[#allocation5 + $0x100] sm:$0xff]
    %v265 = vld [vmem:[#allocation5 + $0x108] sm:$0xff]
    %v266 = vld [vmem:[#allocation5 + $0x110] sm:$0xff]
    %v267 = vld [vmem:[#allocation5 + $0x118] sm:$0xff]
    %v268 = vld [vmem:[#allocation5 + $0x120] sm:$0xff]
    %v269 = vld [vmem:[#allocation5 + $0x128] sm:$0xff]
    %v270 = vld [vmem:[#allocation5 + $0x130] sm:$0xff]
    %v271 = vld [vmem:[#allocation5 + $0x138] sm:$0xff]
    %v272 = vld [vmem:[#allocation5 + $0x140] sm:$0xff]
    %v273 = vld [vmem:[#allocation5 + $0x148] sm:$0xff]
    %v274 = vld [vmem:[#allocation5 + $0x150] sm:$0xff]
    %v275 = vld [vmem:[#allocation5 + $0x158] sm:$0xff]
    %v276 = vld [vmem:[#allocation5 + $0x160] sm:$0xff]
    %v277 = vld [vmem:[#allocation5 + $0x168] sm:$0xff]
    %v278 = vld [vmem:[#allocation5 + $0x170] sm:$0xff]
    %v279 = vld [vmem:[#allocation5 + $0x178] sm:$0xff]
    %v280 = vld [vmem:[#allocation5 + $0x180] sm:$0xff]
    %v281 = vld [vmem:[#allocation5 + $0x188] sm:$0xff]
    %v282 = vld [vmem:[#allocation5 + $0x190] sm:$0xff]
    %v283 = vld [vmem:[#allocation5 + $0x198] sm:$0xff]
    %v284 = vld [vmem:[#allocation5 + $0x1a0] sm:$0xff]
    %v285 = vld [vmem:[#allocation5 + $0x1a8] sm:$0xff]
    %v286 = vld [vmem:[#allocation5 + $0x1b0] sm:$0xff]
    %v287 = vld [vmem:[#allocation5 + $0x1b8] sm:$0xff]
    %v288 = vld [vmem:[#allocation5 + $0x1c0] sm:$0xff]
    %v289 = vld [vmem:[#allocation5 + $0x1c8] sm:$0xff]
    %v290 = vld [vmem:[#allocation5 + $0x1d0] sm:$0xff]
    %v291 = vld [vmem:[#allocation5 + $0x1d8] sm:$0xff]
    %v292 = vld [vmem:[#allocation5 + $0x1e0] sm:$0xff]
    %v293 = vld [vmem:[#allocation5 + $0x1e8] sm:$0xff]
    %v294 = vld [vmem:[#allocation5 + $0x1f0] sm:$0xff]
    %v295 = vld [vmem:[#allocation5 + $0x1f8] sm:$0xff]
    %v296 = vld [vmem:[%s4] sm:$0x3]
    %v298 = vlaneseq
    %v299 = vshrl.u32 %v298, 7
    %v300 = vsub.s32 0, %v299
    %v301 = vrot.slane %v296, %v300
    %v302 = vlaneseq
    %v303 = vshrl.u32 %v302, 7
    %v304 = vsub.s32 1, %v303
    %v305 = vrot.slane %v296, %v304
    %v372 = vunpack.c.l.b16 %v232
    %v373 = vunpack.c.h.b16 %v232
    %v374 = vunpack.c.l.b16 %v233
    %v375 = vunpack.c.h.b16 %v233
    %v376 = vunpack.c.l.b16 %v234
    %v377 = vunpack.c.h.b16 %v234
    %v378 = vunpack.c.l.b16 %v235
    %v379 = vunpack.c.h.b16 %v235
    %v380 = vunpack.c.l.b16 %v236
    %v381 = vunpack.c.h.b16 %v236
    %v382 = vunpack.c.l.b16 %v237
    %v383 = vunpack.c.h.b16 %v237
    %v384 = vunpack.c.l.b16 %v238
    %v385 = vunpack.c.h.b16 %v238
    %v386 = vunpack.c.l.b16 %v239
    %v387 = vunpack.c.h.b16 %v239
    %v388 = vunpack.c.l.b16 %v240
    %v389 = vunpack.c.h.b16 %v240
    %v390 = vunpack.c.l.b16 %v241
    %v391 = vunpack.c.h.b16 %v241
    %v392 = vunpack.c.l.b16 %v242
    %v393 = vunpack.c.h.b16 %v242
    %v394 = vunpack.c.l.b16 %v243
    %v395 = vunpack.c.h.b16 %v243
    %v396 = vunpack.c.l.b16 %v244
    %v397 = vunpack.c.h.b16 %v244
    %v398 = vunpack.c.l.b16 %v245
    %v399 = vunpack.c.h.b16 %v245
    %v400 = vunpack.c.l.b16 %v246
    %v401 = vunpack.c.h.b16 %v246
    %v402 = vunpack.c.l.b16 %v247
    %v403 = vunpack.c.h.b16 %v247
    %v404 = vunpack.c.l.b16 %v248
    %v405 = vunpack.c.h.b16 %v248
    %v406 = vunpack.c.l.b16 %v249
    %v407 = vunpack.c.h.b16 %v249
    %v408 = vunpack.c.l.b16 %v250
    %v409 = vunpack.c.h.b16 %v250
    %v410 = vunpack.c.l.b16 %v251
    %v411 = vunpack.c.h.b16 %v251
    %v412 = vunpack.c.l.b16 %v252
    %v413 = vunpack.c.h.b16 %v252
    %v414 = vunpack.c.l.b16 %v253
    %v415 = vunpack.c.h.b16 %v253
    %v416 = vunpack.c.l.b16 %v254
    %v417 = vunpack.c.h.b16 %v254
    %v418 = vunpack.c.l.b16 %v255
    %v419 = vunpack.c.h.b16 %v255
    %v420 = vunpack.c.l.b16 %v256
    %v421 = vunpack.c.h.b16 %v256
    %v422 = vunpack.c.l.b16 %v257
    %v423 = vunpack.c.h.b16 %v257
    %v424 = vunpack.c.l.b16 %v258
    %v425 = vunpack.c.h.b16 %v258
    %v426 = vunpack.c.l.b16 %v259
    %v427 = vunpack.c.h.b16 %v259
    %v428 = vunpack.c.l.b16 %v260
    %v429 = vunpack.c.h.b16 %v260
    %v430 = vunpack.c.l.b16 %v261
    %v431 = vunpack.c.h.b16 %v261
    %v432 = vunpack.c.l.b16 %v262
    %v433 = vunpack.c.h.b16 %v262
    %v434 = vunpack.c.l.b16 %v263
    %v435 = vunpack.c.h.b16 %v263
    %v436 = vunpack.c.l.b16 %v264
    %v437 = vunpack.c.h.b16 %v264
    %v438 = vunpack.c.l.b16 %v265
    %v439 = vunpack.c.h.b16 %v265
    %v440 = vunpack.c.l.b16 %v266
    %v441 = vunpack.c.h.b16 %v266
    %v442 = vunpack.c.l.b16 %v267
    %v443 = vunpack.c.h.b16 %v267
    %v444 = vunpack.c.l.b16 %v268
    %v445 = vunpack.c.h.b16 %v268
    %v446 = vunpack.c.l.b16 %v269
    %v447 = vunpack.c.h.b16 %v269
    %v448 = vunpack.c.l.b16 %v270
    %v449 = vunpack.c.h.b16 %v270
    %v450 = vunpack.c.l.b16 %v271
    %v451 = vunpack.c.h.b16 %v271
    %v452 = vunpack.c.l.b16 %v272
    %v453 = vunpack.c.h.b16 %v272
    %v454 = vunpack.c.l.b16 %v273
    %v455 = vunpack.c.h.b16 %v273
    %v456 = vunpack.c.l.b16 %v274
    %v457 = vunpack.c.h.b16 %v274
    %v458 = vunpack.c.l.b16 %v275
    %v459 = vunpack.c.h.b16 %v275
    %v460 = vunpack.c.l.b16 %v276
    %v461 = vunpack.c.h.b16 %v276
    %v462 = vunpack.c.l.b16 %v277
    %v463 = vunpack.c.h.b16 %v277
    %v464 = vunpack.c.l.b16 %v278
    %v465 = vunpack.c.h.b16 %v278
    %v466 = vunpack.c.l.b16 %v279
    %v467 = vunpack.c.h.b16 %v279
    %v468 = vunpack.c.l.b16 %v280
    %v469 = vunpack.c.h.b16 %v280
    %v470 = vunpack.c.l.b16 %v281
    %v471 = vunpack.c.h.b16 %v281
    %v472 = vunpack.c.l.b16 %v282
    %v473 = vunpack.c.h.b16 %v282
    %v474 = vunpack.c.l.b16 %v283
    %v475 = vunpack.c.h.b16 %v283
    %v476 = vunpack.c.l.b16 %v284
    %v477 = vunpack.c.h.b16 %v284
    %v478 = vunpack.c.l.b16 %v285
    %v479 = vunpack.c.h.b16 %v285
    %v480 = vunpack.c.l.b16 %v286
    %v481 = vunpack.c.h.b16 %v286
    %v482 = vunpack.c.l.b16 %v287
    %v483 = vunpack.c.h.b16 %v287
    %v484 = vunpack.c.l.b16 %v288
    %v485 = vunpack.c.h.b16 %v288
    %v486 = vunpack.c.l.b16 %v289
    %v487 = vunpack.c.h.b16 %v289
    %v488 = vunpack.c.l.b16 %v290
    %v489 = vunpack.c.h.b16 %v290
    %v490 = vunpack.c.l.b16 %v291
    %v491 = vunpack.c.h.b16 %v291
    %v492 = vunpack.c.l.b16 %v292
    %v493 = vunpack.c.h.b16 %v292
    %v494 = vunpack.c.l.b16 %v293
    %v495 = vunpack.c.h.b16 %v293
    %v496 = vunpack.c.l.b16 %v294
    %v497 = vunpack.c.h.b16 %v294
    %v498 = vunpack.c.l.b16 %v295
    %v499 = vunpack.c.h.b16 %v295
    %v500 = vpack.c.b16 %v374, %v372
    %v501 = vpack.c.b16 %v375, %v373
    %v502 = vpack.c.b16 %v378, %v376
    %v503 = vpack.c.b16 %v379, %v377
    %v504 = vpack.c.b16 %v382, %v380
    %v505 = vpack.c.b16 %v383, %v381
    %v506 = vpack.c.b16 %v386, %v384
    %v507 = vpack.c.b16 %v387, %v385
    %v508 = vpack.c.b16 %v390, %v388
    %v509 = vpack.c.b16 %v391, %v389
    %v510 = vpack.c.b16 %v394, %v392
    %v511 = vpack.c.b16 %v395, %v393
    %v512 = vpack.c.b16 %v398, %v396
    %v513 = vpack.c.b16 %v399, %v397
    %v514 = vpack.c.b16 %v402, %v400
    %v515 = vpack.c.b16 %v403, %v401
    %v516 = vpack.c.b16 %v406, %v404
    %v517 = vpack.c.b16 %v407, %v405
    %v518 = vpack.c.b16 %v410, %v408
    %v519 = vpack.c.b16 %v411, %v409
    %v520 = vpack.c.b16 %v414, %v412
    %v521 = vpack.c.b16 %v415, %v413
    %v522 = vpack.c.b16 %v418, %v416
    %v523 = vpack.c.b16 %v419, %v417
    %v524 = vpack.c.b16 %v422, %v420
    %v525 = vpack.c.b16 %v423, %v421
    %v526 = vpack.c.b16 %v426, %v424
    %v527 = vpack.c.b16 %v427, %v425
    %v528 = vpack.c.b16 %v430, %v428
    %v529 = vpack.c.b16 %v431, %v429
    %v530 = vpack.c.b16 %v434, %v432
    %v531 = vpack.c.b16 %v435, %v433
    %v532 = vpack.c.b16 %v438, %v436
    %v533 = vpack.c.b16 %v439, %v437
    %v534 = vpack.c.b16 %v442, %v440
    %v535 = vpack.c.b16 %v443, %v441
    %v536 = vpack.c.b16 %v446, %v444
    %v537 = vpack.c.b16 %v447, %v445
    %v538 = vpack.c.b16 %v450, %v448
    %v539 = vpack.c.b16 %v451, %v449
    %v540 = vpack.c.b16 %v454, %v452
    %v541 = vpack.c.b16 %v455, %v453
    %v542 = vpack.c.b16 %v458, %v456
    %v543 = vpack.c.b16 %v459, %v457
    %v544 = vpack.c.b16 %v462, %v460
    %v545 = vpack.c.b16 %v463, %v461
    %v546 = vpack.c.b16 %v466, %v464
    %v547 = vpack.c.b16 %v467, %v465
    %v548 = vpack.c.b16 %v470, %v468
    %v549 = vpack.c.b16 %v471, %v469
    %v550 = vpack.c.b16 %v474, %v472
    %v551 = vpack.c.b16 %v475, %v473
    %v552 = vpack.c.b16 %v478, %v476
    %v553 = vpack.c.b16 %v479, %v477
    %v554 = vpack.c.b16 %v482, %v480
    %v555 = vpack.c.b16 %v483, %v481
    %v556 = vpack.c.b16 %v486, %v484
    %v557 = vpack.c.b16 %v487, %v485
    %v558 = vpack.c.b16 %v490, %v488
    %v559 = vpack.c.b16 %v491, %v489
    %v560 = vpack.c.b16 %v494, %v492
    %v561 = vpack.c.b16 %v495, %v493
    %v562 = vpack.c.b16 %v498, %v496
    %v563 = vpack.c.b16 %v499, %v497
    %628 = vmatprep.subr.bf16.mxu0 %v501
    %629 = vmatpush1.bf16.msra.mxu0 %v500
    %630 = vmatprep.subr.bf16.mxu0 %v503
    %631 = vmatpush1.bf16.msra.mxu0 %v502
    %632 = vmatprep.subr.bf16.mxu0 %v505
    %633 = vmatpush1.bf16.msra.mxu0 %v504
    %634 = vmatprep.subr.bf16.mxu0 %v507
    %635 = vmatpush1.bf16.msra.mxu0 %v506
    %636 = vmatprep.subr.bf16.mxu0 %v509
    %637 = vmatpush1.bf16.msra.mxu0 %v508
    %638 = vmatprep.subr.bf16.mxu0 %v511
    %639 = vmatpush1.bf16.msra.mxu0 %v510
    %640 = vmatprep.subr.bf16.mxu0 %v513
    %641 = vmatpush1.bf16.msra.mxu0 %v512
    %642 = vmatprep.subr.bf16.mxu0 %v515
    %643 = vmatpush1.bf16.msra.mxu0 %v514
    %644 = vmatprep.subr.bf16.mxu0 %v517
    %645 = vmatpush1.bf16.msra.mxu0 %v516
    %646 = vmatprep.subr.bf16.mxu0 %v519
    %647 = vmatpush1.bf16.msra.mxu0 %v518
    %648 = vmatprep.subr.bf16.mxu0 %v521
    %649 = vmatpush1.bf16.msra.mxu0 %v520
    %650 = vmatprep.subr.bf16.mxu0 %v523
    %651 = vmatpush1.bf16.msra.mxu0 %v522
    %652 = vmatprep.subr.bf16.mxu0 %v525
    %653 = vmatpush1.bf16.msra.mxu0 %v524
    %654 = vmatprep.subr.bf16.mxu0 %v527
    %655 = vmatpush1.bf16.msra.mxu0 %v526
    %656 = vmatprep.subr.bf16.mxu0 %v529
    %657 = vmatpush1.bf16.msra.mxu0 %v528
    %658 = vmatprep.subr.bf16.mxu0 %v531
    %659 = vmatpush1.bf16.msra.mxu0 %v530
    %660 = vmatprep.mubr.bf16.mxu0 %v229
    %661 = vmatmul.mubr.bf16.gmra.mrb[0].mxu0 %v228
    %v662 = vpop.f32.mrb[0].mxu0
    %v663 = vadd.f32 %v301, %v662
    %v664 = vpop.f32.mrb[0].mxu0
    %v665 = vadd.f32 %v305, %v664
    %v666 = vpop.f32.mrb[0].mxu0
    %v667 = vadd.f32 %v301, %v666
    %v668 = vpop.f32.mrb[0].mxu0
    %v669 = vadd.f32 %v305, %v668
    %670 = vdwg.mxu0
    %671 = vmatprep.subr.bf16.mxu0 %v533
    %672 = vmatpush1.bf16.msra.mxu0 %v532
    %673 = vmatprep.subr.bf16.mxu0 %v535
    %674 = vmatpush1.bf16.msra.mxu0 %v534
    %675 = vmatprep.subr.bf16.mxu0 %v537
    %676 = vmatpush1.bf16.msra.mxu0 %v536
    %677 = vmatprep.subr.bf16.mxu0 %v539
    %678 = vmatpush1.bf16.msra.mxu0 %v538
    %679 = vmatprep.subr.bf16.mxu0 %v541
    %680 = vmatpush1.bf16.msra.mxu0 %v540
    %681 = vmatprep.subr.bf16.mxu0 %v543
    %682 = vmatpush1.bf16.msra.mxu0 %v542
    %683 = vmatprep.subr.bf16.mxu0 %v545
    %684 = vmatpush1.bf16.msra.mxu0 %v544
    %685 = vmatprep.subr.bf16.mxu0 %v547
    %686 = vmatpush1.bf16.msra.mxu0 %v546
    %687 = vmatprep.subr.bf16.mxu0 %v549
    %688 = vmatpush1.bf16.msra.mxu0 %v548
    %689 = vmatprep.subr.bf16.mxu0 %v551
    %690 = vmatpush1.bf16.msra.mxu0 %v550
    %691 = vmatprep.subr.bf16.mxu0 %v553
    %692 = vmatpush1.bf16.msra.mxu0 %v552
    %693 = vmatprep.subr.bf16.mxu0 %v555
    %694 = vmatpush1.bf16.msra.mxu0 %v554
    %695 = vmatprep.subr.bf16.mxu0 %v557
    %696 = vmatpush1.bf16.msra.mxu0 %v556
    %697 = vmatprep.subr.bf16.mxu0 %v559
    %698 = vmatpush1.bf16.msra.mxu0 %v558
    %699 = vmatprep.subr.bf16.mxu0 %v561
    %700 = vmatpush1.bf16.msra.mxu0 %v560
    %701 = vmatprep.subr.bf16.mxu0 %v563
    %702 = vmatpush1.bf16.msra.mxu0 %v562
    %703 = vmatprep.mubr.bf16.mxu0 %v231
    %704 = vmatmul.mubr.bf16.gmra.mrb[0].mxu0 %v230
    %v705 = vpop.f32.mrb[0].mxu0
    %v706 = vadd.f32 %v663, %v705
    %v707 = vpop.f32.mrb[0].mxu0
    %v708 = vadd.f32 %v665, %v707
    %v709 = vpop.f32.mrb[0].mxu0
    %v710 = vadd.f32 %v667, %v709
    %v711 = vpop.f32.mrb[0].mxu0
    %v712 = vadd.f32 %v669, %v711
    %713 = vdwg.mxu0
    %v714 = vmax.f32 %v706, 0.0
    %v715 = vmax.f32 %v708, 0.0
    %v716 = vmax.f32 %v710, 0.0
    %v717 = vmax.f32 %v712, 0.0
    %718 = vxpose.xlu0.b32.start [1/16] %v714, 128
    %719 = vxpose.xlu0.b32.cont [2/16] %v716, 128
    %720 = vxpose.xlu0.b32.cont [3/16] 0.0, 128
    %721 = vxpose.xlu0.b32.cont [4/16] 0.0, 128
    %722 = vxpose.xlu0.b32.cont [5/16] 0.0, 128
    %723 = vxpose.xlu0.b32.cont [6/16] 0.0, 128
    %724 = vxpose.xlu0.b32.cont [7/16] 0.0, 128
    %725 = vxpose.xlu0.b32.cont [8/16] 0.0, 128
    %726 = vxpose.xlu0.b32.cont [9/16] 0.0, 128
    %727 = vxpose.xlu0.b32.cont [10/16] 0.0, 128
    %728 = vxpose.xlu0.b32.cont [11/16] 0.0, 128
    %729 = vxpose.xlu0.b32.cont [12/16] 0.0, 128
    %730 = vxpose.xlu0.b32.cont [13/16] 0.0, 128
    %731 = vxpose.xlu0.b32.cont [14/16] 0.0, 128
    %732 = vxpose.xlu0.b32.cont [15/16] 0.0, 128
    %733 = vxpose.xlu0.b32.end [16/16] 0.0, 128
    %v734 = vpop.trf.xlu0
    %v735 = vpop.trf.xlu0
    %v736 = vpop.trf.xlu0
    %v737 = vpop.trf.xlu0
    %v738 = vpop.trf.xlu0
    %v739 = vpop.trf.xlu0
    %v740 = vpop.trf.xlu0
    %v741 = vpop.trf.xlu0
    %v742 = vpop.trf.xlu0
    %v743 = vpop.trf.xlu0
    %v744 = vpop.trf.xlu0
    %v745 = vpop.trf.xlu0
    %v746 = vpop.trf.xlu0
    %v747 = vpop.trf.xlu0
    %v748 = vpop.trf.xlu0
    %v749 = vpop.trf.xlu0
    %750 = vxpose.xlu0.b32.start [1/16] %v715, 128
    %751 = vxpose.xlu0.b32.cont [2/16] %v717, 128
    %752 = vxpose.xlu0.b32.cont [3/16] 0.0, 128
    %753 = vxpose.xlu0.b32.cont [4/16] 0.0, 128
    %754 = vxpose.xlu0.b32.cont [5/16] 0.0, 128
    %755 = vxpose.xlu0.b32.cont [6/16] 0.0, 128
    %756 = vxpose.xlu0.b32.cont [7/16] 0.0, 128
    %757 = vxpose.xlu0.b32.cont [8/16] 0.0, 128
    %758 = vxpose.xlu0.b32.cont [9/16] 0.0, 128
    %759 = vxpose.xlu0.b32.cont [10/16] 0.0, 128
    %760 = vxpose.xlu0.b32.cont [11/16] 0.0, 128
    %761 = vxpose.xlu0.b32.cont [12/16] 0.0, 128
    %762 = vxpose.xlu0.b32.cont [13/16] 0.0, 128
    %763 = vxpose.xlu0.b32.cont [14/16] 0.0, 128
    %764 = vxpose.xlu0.b32.cont [15/16] 0.0, 128
    %765 = vxpose.xlu0.b32.end [16/16] 0.0, 128
    %v766 = vpop.trf.xlu0
    %v767 = vpop.trf.xlu0
    %v768 = vpop.trf.xlu0
    %v769 = vpop.trf.xlu0
    %v770 = vpop.trf.xlu0
    %v771 = vpop.trf.xlu0
    %v772 = vpop.trf.xlu0
    %v773 = vpop.trf.xlu0
    %v774 = vpop.trf.xlu0
    %v775 = vpop.trf.xlu0
    %v776 = vpop.trf.xlu0
    %v777 = vpop.trf.xlu0
    %v778 = vpop.trf.xlu0
    %v779 = vpop.trf.xlu0
    %v780 = vpop.trf.xlu0
    %v781 = vpop.trf.xlu0
    %v782 = vpack.c.bf16 %v735, %v734
    %v783 = vpack.c.bf16 %v737, %v736
    %v784 = vpack.c.bf16 %v739, %v738
    %v785 = vpack.c.bf16 %v741, %v740
    %v786 = vpack.c.bf16 %v743, %v742
    %v787 = vpack.c.bf16 %v745, %v744
    %v788 = vpack.c.bf16 %v747, %v746
    %v789 = vpack.c.bf16 %v749, %v748
    %v790 = vpack.c.bf16 %v767, %v766
    %v791 = vpack.c.bf16 %v769, %v768
    %v792 = vpack.c.bf16 %v771, %v770
    %v793 = vpack.c.bf16 %v773, %v772
    %v794 = vpack.c.bf16 %v775, %v774
    %v795 = vpack.c.bf16 %v777, %v776
    %v796 = vpack.c.bf16 %v779, %v778
    %v797 = vpack.c.bf16 %v781, %v780
    %v798 = vld [vmem:[%s5] sm:$0xff]
    %v800 = vunpack.c.l.b16 %v798
    %v801 = vunpack.c.h.b16 %v798
    %v802 = vpack.c.b16 %v800, %v800
    %v803 = vpack.c.b16 %v801, %v801
    %806 = vmatprep.subr.bf16.mxu0 0
    %807 = vmatpush1.bf16.msra.mxu0 %v782
    %808 = vmatprep.subr.bf16.mxu0 0
    %809 = vmatpush1.bf16.msra.mxu0 %v783
    %810 = vmatprep.subr.bf16.mxu0 0
    %811 = vmatpush1.bf16.msra.mxu0 %v784
    %812 = vmatprep.subr.bf16.mxu0 0
    %813 = vmatpush1.bf16.msra.mxu0 %v785
    %814 = vmatprep.subr.bf16.mxu0 0
    %815 = vmatpush1.bf16.msra.mxu0 %v786
    %816 = vmatprep.subr.bf16.mxu0 0
    %817 = vmatpush1.bf16.msra.mxu0 %v787
    %818 = vmatprep.subr.bf16.mxu0 0
    %819 = vmatpush1.bf16.msra.mxu0 %v788
    %820 = vmatprep.subr.bf16.mxu0 0
    %821 = vmatpush1.bf16.msra.mxu0 %v789
    %822 = vmatprep.subr.bf16.mxu0 0
    %823 = vmatpush1.bf16.msra.mxu0 %v790
    %824 = vmatprep.subr.bf16.mxu0 0
    %825 = vmatpush1.bf16.msra.mxu0 %v791
    %826 = vmatprep.subr.bf16.mxu0 0
    %827 = vmatpush1.bf16.msra.mxu0 %v792
    %828 = vmatprep.subr.bf16.mxu0 0
    %829 = vmatpush1.bf16.msra.mxu0 %v793
    %830 = vmatprep.subr.bf16.mxu0 0
    %831 = vmatpush1.bf16.msra.mxu0 %v794
    %832 = vmatprep.subr.bf16.mxu0 0
    %833 = vmatpush1.bf16.msra.mxu0 %v795
    %834 = vmatprep.subr.bf16.mxu0 0
    %835 = vmatpush1.bf16.msra.mxu0 %v796
    %836 = vmatprep.subr.bf16.mxu0 0
    %837 = vmatpush1.bf16.msra.mxu0 %v797
    %838 = vmatprep.mubr.bf16.mxu0 %v803
    %839 = vmatmul.mubr.bf16.gmra.mrb[0].mxu0 %v802
    %v840 = vpop.f32.mrb[0].mxu0
    %v841 = vadd.f32 0.0, %v840
    %v842 = vpop.f32.mrb[0].mxu0
    %v843 = vpop.f32.mrb[0].mxu0
    %v844 = vpop.f32.mrb[0].mxu0
    %845 = vdwg.mxu0
    %v846 = vld [vmem:[#allocation2] sm:$0x1]
    %848 = vset.pattern.permute.xlu0 0
    %849 = vperm.xlu0 %848, %v846
    %v850 = vpop.permute.xlu0 %849
    %v852 = vlaneseq
    %v853 = vshrl.u32 %v852, 7
    %v854 = vsub.s32 0, %v853
    %v855 = vrot.slane %v850, %v854
    %v856 = vadd.f32 %v841, %v855
    %v857 = vsub.f32 0.0, %v856
    %v858 = vmul.f32 %v857, 1.442695
    %v859 = vpow.pop %v858
    %v860 = vadd.f32 %v859, 1.0
    %v861 = vrcp.pop %v860
    %vm862 = vcmask 122880
    %863 = vst.msk [vmem:[%s7] sm:$0x1] %vm862, %v861
    // Predicated region
    $region38: #{_forward.1} parent=1 // pred_check
      _
    $region39: #{_forward.1} parent=1 // pred_check_branch
      %865 = sbr.rel (0) target = $region41
    $region40: #{_forward.1} parent=1 // pred_region
      _
    $region41: #{_forward.1} parent=1 // pred_fallthru
      _
    // Predicated region
    $region42: #{_forward.1} parent=1 // pred_check
      _
    $region43: #{_forward.1} parent=1 // pred_check_branch
      %867 = sbr.rel (0) target = $region45
    $region44: #{_forward.1} parent=1 // pred_region
      _
    $region45: #{_forward.1} parent=1 // pred_fallthru
      _
    %868 = vsyncpa [#allocation4], 1
    %869 = vsyncpa [#allocation6], 1

</llo_original>
